<compile_context>
chip_gen: v7x
topology: tpu7x:2x2x1
jax: 0.10.0
libtpu: 0.0.40
codegen_flags: <defaults>
</compile_context>

<pallas_src>
import functools

import jax
import jax.numpy as jnp
from jax.experimental import pallas as pl
from jax.experimental.pallas import tpu as pltpu

LANE = 128


# ----------------------------------------------------------------------------
# Fused Pallas kernel
# ----------------------------------------------------------------------------
def _full_spec(shape):
    # whole-array block (no grid); last two dims equal the full array dims,
    # which satisfies the (8, 128) divisibility rule.
    return pl.BlockSpec(shape, lambda: (0,) * len(shape))


def fused_graphsage_kernel(*refs, num_layers, num_graphs, nodes_per_graph,
                           dim_embedding):
    """Entire GraphSAGE forward in one kernel invocation (VMEM-resident).

    refs layout (inputs..., output, scratch):
      [0] a_ref       (N, N)       bf16  row-normalized adjacency (mean aggr)
      [1] x_ref       (N, F)       f32   node features
      per layer i:
        [2+2i] wcat_ref (2*d_in, D) bf16  concat([W_l ; W_r], axis=0)
        [3+2i] b_ref    (1, D)      f32   lin_l bias
      fc1_w (bf16), fc1_b (f32), fc2_w_pad (bf16), fc2_b_pad (f32)
      o_ref     (G, 128)  f32   lane-padded logits
      hcat_ref  (N, L*D)  f32   VMEM scratch holding the concat of layer outs
    """
    a_ref, x_ref = refs[0], refs[1]
    layer_refs = refs[2:2 + 2 * num_layers]
    fc1_w_ref, fc1_b_ref, fc2_w_ref, fc2_b_ref = refs[
        2 + 2 * num_layers:6 + 2 * num_layers]
    o_ref = refs[6 + 2 * num_layers]
    hcat_ref = refs[7 + 2 * num_layers]

    a_bf = a_ref[...]                       # bf16 MXU operand, reused per layer
    h = x_ref[...]                          # f32 activations

    for i in range(num_layers):             # static, small unrolled loop
        w_cat = layer_refs[2 * i][...]      # (2*d_in, D) bf16
        b_l = layer_refs[2 * i + 1][...]    # (1, D) f32
        # mean neighborhood aggregation: agg = A_mean @ h  (bf16 in, f32 acc)
        agg = jnp.dot(a_bf, h.astype(jnp.bfloat16),
                      preferred_element_type=jnp.float32)
        # fused lin_l / lin_r:  [agg | h] @ [W_l ; W_r] + b_l
        cat = jnp.concatenate([agg, h], axis=1).astype(jnp.bfloat16)
        z = jnp.dot(cat, w_cat, preferred_element_type=jnp.float32) + b_l
        # write layer output directly into its column slice of the concat
        hcat_ref[:, i * dim_embedding:(i + 1) * dim_embedding] = z
        h = z

    # global max pool over contiguous, equal-size graph segments
    hcat = hcat_ref[...]                                        # (N, L*D) f32
    segs = [
        jnp.max(hcat[g * nodes_per_graph:(g + 1) * nodes_per_graph, :],
                axis=0, keepdims=True)
        for g in range(num_graphs)
    ]
    pooled = jnp.concatenate(segs, axis=0)                      # (G, L*D) f32

    # MLP head: relu(fc1) -> fc2   (bf16 MXU operands, f32 elementwise)
    hidden = jnp.dot(pooled.astype(jnp.bfloat16), fc1_w_ref[...],
                     preferred_element_type=jnp.float32) + fc1_b_ref[...]
    hidden = jnp.maximum(hidden, 0.0)
    out = jnp.dot(hidden.astype(jnp.bfloat16), fc2_w_ref[...],
                  preferred_element_type=jnp.float32) + fc2_b_ref[...]
    o_ref[...] = out.astype(o_ref.dtype)                        # (G, 128) dense


# ----------------------------------------------------------------------------
# Wrapper (glue: weight fusion, bf16 casts, lane padding, single pallas_call)
# ----------------------------------------------------------------------------
def graphsage_forward(x, a_mean, params, *, num_graphs, nodes_per_graph):
    n, _ = x.shape
    num_layers = len(params["layers"])
    dim_embedding = params["layers"][0][0].shape[1]
    dim_target = params["fc2_w"].shape[1]
    d_cat = num_layers * dim_embedding
    d_out_pad = ((dim_target + LANE - 1) // LANE) * LANE

    inputs = [a_mean.astype(jnp.bfloat16), x]
    in_specs = [_full_spec(a_mean.shape), _full_spec(x.shape)]
    for (w_l, b_l, w_r) in params["layers"]:
        w_cat = jnp.concatenate([w_l, w_r], axis=0).astype(jnp.bfloat16)
        inputs += [w_cat, b_l]
        in_specs += [_full_spec(w_cat.shape), _full_spec(b_l.shape)]

    fc1_w = params["fc1_w"].astype(jnp.bfloat16)
    fc1_b = params["fc1_b"]
    fc2_w = jnp.zeros((dim_embedding, d_out_pad), jnp.float32)
    fc2_w = fc2_w.at[:, :dim_target].set(params["fc2_w"]).astype(jnp.bfloat16)
    fc2_b = jnp.zeros((1, d_out_pad), jnp.float32)
    fc2_b = fc2_b.at[:, :dim_target].set(params["fc2_b"])
    inputs += [fc1_w, fc1_b, fc2_w, fc2_b]
    in_specs += [_full_spec(fc1_w.shape), _full_spec(fc1_b.shape),
                 _full_spec(fc2_w.shape), _full_spec(fc2_b.shape)]

    kernel = functools.partial(
        fused_graphsage_kernel, num_layers=num_layers, num_graphs=num_graphs,
        nodes_per_graph=nodes_per_graph, dim_embedding=dim_embedding)

    out_pad = pl.pallas_call(
        kernel,
        out_shape=jax.ShapeDtypeStruct((num_graphs, d_out_pad), jnp.float32),
        in_specs=in_specs,
        out_specs=_full_spec((num_graphs, d_out_pad)),
        scratch_shapes=[pltpu.VMEM((n, d_cat), jnp.float32)],
    )(*inputs)
    return out_pad[:, :dim_target]


# ----------------------------------------------------------------------------
# Pure-JAX references for correctness checks
# ----------------------------------------------------------------------------
def graphsage_reference_f32(x, a_mean, params, num_graphs, nodes_per_graph):
    h = x
    feats = []
    for (w_l, b_l, w_r) in params["layers"]:
        agg = a_mean @ h
        h = agg @ w_l + b_l + h @ w_r
        feats.append(h)
    hcat = jnp.concatenate(feats, axis=1)
    pooled = jnp.max(hcat.reshape(num_graphs, nodes_per_graph, -1), axis=1)
    hidden = jnp.maximum(pooled @ params["fc1_w"] + params["fc1_b"], 0.0)
    return hidden @ params["fc2_w"] + params["fc2_b"]


def graphsage_reference_bf16(x, a_mean, params, num_graphs, nodes_per_graph):
    # mirrors the kernel's bf16-operand / f32-accumulate math exactly
    bf = jnp.bfloat16
    a_bf = a_mean.astype(bf)
    h = x
    feats = []
    for (w_l, b_l, w_r) in params["layers"]:
        w_cat = jnp.concatenate([w_l, w_r], axis=0).astype(bf)
        agg = jnp.dot(a_bf, h.astype(bf), preferred_element_type=jnp.float32)
        cat = jnp.concatenate([agg, h], axis=1).astype(bf)
        h = jnp.dot(cat, w_cat, preferred_element_type=jnp.float32) + b_l
        feats.append(h)
    hcat = jnp.concatenate(feats, axis=1)
    pooled = jnp.max(hcat.reshape(num_graphs, nodes_per_graph, -1), axis=1)
    hidden = jnp.maximum(
        jnp.dot(pooled.astype(bf), params["fc1_w"].astype(bf),
                preferred_element_type=jnp.float32) + params["fc1_b"], 0.0)
    return jnp.dot(hidden.astype(bf), params["fc2_w"].astype(bf),
                   preferred_element_type=jnp.float32) + params["fc2_b"]


# ----------------------------------------------------------------------------
# Main
# ----------------------------------------------------------------------------
if __name__ == "__main__":
    # config (mirrors the PyTorch module's config dict indexing [1])
    config = {
        "num_layers": (None, 2),
        "dim_embedding": (None, 32),
        "aggregation": (None, "mean"),
    }
    num_layers = config["num_layers"][1]
    dim_embedding = config["dim_embedding"][1]
    dim_features = 8
    dim_target = 4

    num_nodes = 16
    num_graphs = 2
    nodes_per_graph = num_nodes // num_graphs

    # ---- deterministic synthetic graph (two 8-node bidirectional rings) ----
    # nodes are contiguous per graph (standard PyG batching layout)
    src, dst = [], []
    for g in range(num_graphs):
        off = g * nodes_per_graph
        for i in range(nodes_per_graph):
            a = off + i
            b = off + (i + 1) % nodes_per_graph
            src += [a, b]
            dst += [b, a]
    edge_index = jnp.array([src, dst], dtype=jnp.int32)        # (2, E)
    batch = jnp.repeat(jnp.arange(num_graphs, dtype=jnp.int32),
                       nodes_per_graph)                         # (N,) contiguous

    # dense row-normalized adjacency for mean aggregation (glue, plain JAX)
    adj = jnp.zeros((num_nodes, num_nodes), jnp.float32)
    adj = adj.at[edge_index[1], edge_index[0]].set(1.0)         # msg j -> i
    deg = jnp.sum(adj, axis=1, keepdims=True)
    a_mean = adj / jnp.maximum(deg, 1.0)

    # ---- deterministic parameters ----
    key = jax.random.PRNGKey(0)
    keys = jax.random.split(key, 4 * num_layers + 5)
    params = {"layers": []}
    k_idx = 0
    for i in range(num_layers):
        d_in = dim_features if i == 0 else dim_embedding
        w_l = 0.1 * jax.random.normal(keys[k_idx], (d_in, dim_embedding),
                                      jnp.float32); k_idx += 1
        b_l = 0.1 * jax.random.normal(keys[k_idx], (1, dim_embedding),
                                      jnp.float32); k_idx += 1
        w_r = 0.1 * jax.random.normal(keys[k_idx], (d_in, dim_embedding),
                                      jnp.float32); k_idx += 1
        params["layers"].append((w_l, b_l, w_r))
    params["fc1_w"] = 0.1 * jax.random.normal(
        keys[k_idx], (num_layers * dim_embedding, dim_embedding), jnp.float32)
    k_idx += 1
    params["fc1_b"] = 0.1 * jax.random.normal(
        keys[k_idx], (1, dim_embedding), jnp.float32); k_idx += 1
    params["fc2_w"] = 0.1 * jax.random.normal(
        keys[k_idx], (dim_embedding, dim_target), jnp.float32); k_idx += 1
    params["fc2_b"] = 0.1 * jax.random.normal(
        keys[k_idx], (1, dim_target), jnp.float32); k_idx += 1

    # node features
    x = jax.random.normal(keys[k_idx], (num_nodes, dim_features), jnp.float32)

    # ---- run fused kernel ----
    out = graphsage_forward(x, a_mean, params, num_graphs=num_graphs,
                            nodes_per_graph=nodes_per_graph)
    out = jax.block_until_ready(out)
    assert out.shape == (num_graphs, dim_target)

    # ---- correctness checks ----
    ref_bf16 = graphsage_reference_bf16(x, a_mean, params, num_graphs,
                                        nodes_per_graph)
    ref_f32 = graphsage_reference_f32(x, a_mean, params, num_graphs,
                                      nodes_per_graph)
    assert jnp.allclose(out, ref_bf16, atol=2e-3, rtol=2e-3), \
        "mismatch vs bf16-mirrored reference"
    assert jnp.allclose(out, ref_f32, atol=5e-2, rtol=5e-2), \
        "mismatch vs f32 semantic reference"

    print("KERNEL_OK")
</pallas_src>

<mosaic_0001>
module attributes {stable_mosaic.version = 11 : i64} {
  func.func @fused_graphsage_kernel(%arg0: memref<16x16xbf16, #tpu.memory_space<vmem>>, %arg1: memref<16x8xf32, #tpu.memory_space<vmem>>, %arg2: memref<16x32xbf16, #tpu.memory_space<vmem>>, %arg3: memref<1x32xf32, #tpu.memory_space<vmem>>, %arg4: memref<64x32xbf16, #tpu.memory_space<vmem>>, %arg5: memref<1x32xf32, #tpu.memory_space<vmem>>, %arg6: memref<64x32xbf16, #tpu.memory_space<vmem>>, %arg7: memref<1x32xf32, #tpu.memory_space<vmem>>, %arg8: memref<32x128xbf16, #tpu.memory_space<vmem>>, %arg9: memref<1x128xf32, #tpu.memory_space<vmem>>, %arg10: memref<2x128xf32, #tpu.memory_space<vmem>>, %arg11: memref<16x64xf32, #tpu.memory_space<vmem>>) attributes {dimension_semantics = [], scalar_prefetch = 0 : i64, scratch_operands = 1 : i64, tpu.core_type = #tpu.core_type<tc>} {
    %c0 = arith.constant 0 : index
    %c0_0 = arith.constant 0 : index
    %0 = vector.load %arg0[%c0, %c0_0] : memref<16x16xbf16, #tpu.memory_space<vmem>>, vector<16x16xbf16>
    %c0_1 = arith.constant 0 : index
    %c0_2 = arith.constant 0 : index
    %1 = vector.load %arg1[%c0_1, %c0_2] : memref<16x8xf32, #tpu.memory_space<vmem>>, vector<16x8xf32>
    %c0_3 = arith.constant 0 : index
    %c0_4 = arith.constant 0 : index
    %2 = vector.load %arg2[%c0_3, %c0_4] : memref<16x32xbf16, #tpu.memory_space<vmem>>, vector<16x32xbf16>
    %c0_5 = arith.constant 0 : index
    %c0_6 = arith.constant 0 : index
    %3 = vector.load %arg3[%c0_5, %c0_6] : memref<1x32xf32, #tpu.memory_space<vmem>>, vector<1x32xf32>
    %4 = arith.truncf %1 : vector<16x8xf32> to vector<16x8xbf16>
    %cst = arith.constant dense<0.000000e+00> : vector<16x8xf32>
    %5 = tpu.matmul %0, %4, %cst {dimension_numbers = #tpu.dot_dimension_numbers<[1], [0], [0], [1], [0, 0, 1, 1], [], []>} : vector<16x16xbf16>, vector<16x8xbf16>, vector<16x8xf32> -> vector<16x8xf32>
    %6 = tpu.concatenate %5, %1 in 1 : vector<16x8xf32>, vector<16x8xf32> -> vector<16x16xf32>
    %7 = arith.truncf %6 : vector<16x16xf32> to vector<16x16xbf16>
    %cst_7 = arith.constant dense<0.000000e+00> : vector<16x32xf32>
    %8 = tpu.matmul %7, %2, %cst_7 {dimension_numbers = #tpu.dot_dimension_numbers<[1], [0], [0], [1], [0, 0, 1, 1], [], []>} : vector<16x16xbf16>, vector<16x32xbf16>, vector<16x32xf32> -> vector<16x32xf32>
    %9 = vector.broadcast %3 : vector<1x32xf32> to vector<16x32xf32>
    %10 = arith.addf %8, %9 : vector<16x32xf32>
    %c0_8 = arith.constant 0 : index
    %c0_9 = arith.constant 0 : index
    %11 = vector.load %arg11[%c0_8, %c0_9] : memref<16x64xf32, #tpu.memory_space<vmem>>, vector<16x32xf32>
    tpu.vector_store %arg11[%c0_8, %c0_9], %10 {strides = array<i32>} : memref<16x64xf32, #tpu.memory_space<vmem>>, vector<16x32xf32>,
    %c0_10 = arith.constant 0 : index
    %c0_11 = arith.constant 0 : index
    %12 = vector.load %arg4[%c0_10, %c0_11] : memref<64x32xbf16, #tpu.memory_space<vmem>>, vector<64x32xbf16>
    %c0_12 = arith.constant 0 : index
    %c0_13 = arith.constant 0 : index
    %13 = vector.load %arg5[%c0_12, %c0_13] : memref<1x32xf32, #tpu.memory_space<vmem>>, vector<1x32xf32>
    %14 = arith.truncf %10 : vector<16x32xf32> to vector<16x32xbf16>
    %cst_14 = arith.constant dense<0.000000e+00> : vector<16x32xf32>
    %15 = tpu.matmul %0, %14, %cst_14 {dimension_numbers = #tpu.dot_dimension_numbers<[1], [0], [0], [1], [0, 0, 1, 1], [], []>} : vector<16x16xbf16>, vector<16x32xbf16>, vector<16x32xf32> -> vector<16x32xf32>
    %16 = tpu.concatenate %15, %10 in 1 : vector<16x32xf32>, vector<16x32xf32> -> vector<16x64xf32>
    %17 = arith.truncf %16 : vector<16x64xf32> to vector<16x64xbf16>
    %cst_15 = arith.constant dense<0.000000e+00> : vector<16x32xf32>
    %18 = tpu.matmul %17, %12, %cst_15 {dimension_numbers = #tpu.dot_dimension_numbers<[1], [0], [0], [1], [0, 0, 1, 1], [], []>} : vector<16x64xbf16>, vector<64x32xbf16>, vector<16x32xf32> -> vector<16x32xf32>
    %19 = vector.broadcast %13 : vector<1x32xf32> to vector<16x32xf32>
    %20 = arith.addf %18, %19 : vector<16x32xf32>
    %c0_16 = arith.constant 0 : index
    %c32 = arith.constant 32 : index
    %21 = vector.load %arg11[%c0_16, %c32] : memref<16x64xf32, #tpu.memory_space<vmem>>, vector<16x32xf32>
    tpu.vector_store %arg11[%c0_16, %c32], %20 {strides = array<i32>} : memref<16x64xf32, #tpu.memory_space<vmem>>, vector<16x32xf32>,
    %c0_17 = arith.constant 0 : index
    %c0_18 = arith.constant 0 : index
    %22 = vector.load %arg11[%c0_17, %c0_18] : memref<16x64xf32, #tpu.memory_space<vmem>>, vector<16x64xf32>
    %23 = vector.extract_strided_slice %22 {offsets = [0, 0], sizes = [8, 64], strides = [1, 1]} : vector<16x64xf32> to vector<8x64xf32>
    %cst_19 = arith.constant dense<0xFF800000> : vector<64xf32>
    %24 = vector.multi_reduction <maximumf>, %23, %cst_19 [0] : vector<8x64xf32> to vector<64xf32>
    %25 = vector.shape_cast %24 : vector<64xf32> to vector<1x64xf32>
    %26 = vector.extract_strided_slice %22 {offsets = [8, 0], sizes = [8, 64], strides = [1, 1]} : vector<16x64xf32> to vector<8x64xf32>
    %cst_20 = arith.constant dense<0xFF800000> : vector<64xf32>
    %27 = vector.multi_reduction <maximumf>, %26, %cst_20 [0] : vector<8x64xf32> to vector<64xf32>
    %28 = vector.shape_cast %27 : vector<64xf32> to vector<1x64xf32>
    %29 = tpu.concatenate %25, %28 in 0 : vector<1x64xf32>, vector<1x64xf32> -> vector<2x64xf32>
    %30 = arith.truncf %29 : vector<2x64xf32> to vector<2x64xbf16>
    %c0_21 = arith.constant 0 : index
    %c0_22 = arith.constant 0 : index
    %31 = vector.load %arg6[%c0_21, %c0_22] : memref<64x32xbf16, #tpu.memory_space<vmem>>, vector<64x32xbf16>
    %cst_23 = arith.constant dense<0.000000e+00> : vector<2x32xf32>
    %32 = tpu.matmul %30, %31, %cst_23 {dimension_numbers = #tpu.dot_dimension_numbers<[1], [0], [0], [1], [0, 0, 1, 1], [], []>} : vector<2x64xbf16>, vector<64x32xbf16>, vector<2x32xf32> -> vector<2x32xf32>
    %c0_24 = arith.constant 0 : index
    %c0_25 = arith.constant 0 : index
    %33 = vector.load %arg7[%c0_24, %c0_25] : memref<1x32xf32, #tpu.memory_space<vmem>>, vector<1x32xf32>
    %34 = vector.broadcast %33 : vector<1x32xf32> to vector<2x32xf32>
    %35 = arith.addf %32, %34 : vector<2x32xf32>
    %cst_26 = arith.constant 0.000000e+00 : f32
    %36 = vector.broadcast %cst_26 : f32 to vector<2x32xf32>
    %37 = arith.maximumf %35, %36 : vector<2x32xf32>
    %38 = arith.truncf %37 : vector<2x32xf32> to vector<2x32xbf16>
    %c0_27 = arith.constant 0 : index
    %c0_28 = arith.constant 0 : index
    %39 = vector.load %arg8[%c0_27, %c0_28] : memref<32x128xbf16, #tpu.memory_space<vmem>>, vector<32x128xbf16>
    %cst_29 = arith.constant dense<0.000000e+00> : vector<2x128xf32>
    %40 = tpu.matmul %38, %39, %cst_29 {dimension_numbers = #tpu.dot_dimension_numbers<[1], [0], [0], [1], [0, 0, 1, 1], [], []>} : vector<2x32xbf16>, vector<32x128xbf16>, vector<2x128xf32> -> vector<2x128xf32>
    %c0_30 = arith.constant 0 : index
    %c0_31 = arith.constant 0 : index
    %41 = vector.load %arg9[%c0_30, %c0_31] : memref<1x128xf32, #tpu.memory_space<vmem>>, vector<1x128xf32>
    %42 = vector.broadcast %41 : vector<1x128xf32> to vector<2x128xf32>
    %43 = arith.addf %40, %42 : vector<2x128xf32>
    %c0_32 = arith.constant 0 : index
    %c0_33 = arith.constant 0 : index
    %44 = vector.load %arg10[%c0_32, %c0_33] : memref<2x128xf32, #tpu.memory_space<vmem>>, vector<2x128xf32>
    tpu.vector_store %arg10[%c0_32, %c0_33], %43 {strides = array<i32>} : memref<2x128xf32, #tpu.memory_space<vmem>>, vector<2x128xf32>,
    return
  }
}

</mosaic_0001>

<llo_original>
// kernel: tpu_custom_call.1
$region0: #{tpu_custom_call.1}
  #allocation0 [shape = 'u32[]', space=smem, size = 0x4, offset = 0x4, fixed_abs, tag = 'smem constant byte address 0x4 - core index']
  #allocation1 [shape = 'u32[144,128]{1,0:T(1,128)}', space=vmem, size = 0x12000, scoped, tag = 'internal scratch']
  #allocation2 [shape = 'f32[16,64]{1,0:T(8,128)}', space=vmem, size = 0x2000, scoped, tag = 'scratch operand']
  %s0 = inlined_call_operand.vmem [shape: bf16[16,16], index: 0, kind: input, shape index: {}]
  %s1 = inlined_call_operand.vmem [shape: f32[16,8], index: 1, kind: input, shape index: {}]
  %s2 = inlined_call_operand.vmem [shape: bf16[16,32], index: 2, kind: input, shape index: {}]
  %s3 = inlined_call_operand.vmem [shape: f32[1,32], index: 3, kind: input, shape index: {}]
  %s4 = inlined_call_operand.vmem [shape: bf16[64,32], index: 4, kind: input, shape index: {}]
  %s5 = inlined_call_operand.vmem [shape: f32[1,32], index: 5, kind: input, shape index: {}]
  %s6 = inlined_call_operand.vmem [shape: bf16[64,32], index: 6, kind: input, shape index: {}]
  %s7 = inlined_call_operand.vmem [shape: f32[1,32], index: 7, kind: input, shape index: {}]
  %s8 = inlined_call_operand.vmem [shape: bf16[32,128], index: 8, kind: input, shape index: {}]
  %s9 = inlined_call_operand.vmem [shape: f32[1,128], index: 9, kind: input, shape index: {}]
  %s10 = inlined_call_operand.hbm [shape: f32[2,128], index: 10, kind: output, shape index: {}]
  %s11 = sld [smem:[#allocation0]]
  $region50: #{tpu_custom_call.1} parent=0
    _
  %s13 = ssub.s32 1, %s11
  %s14 = scalar_select 0, %s13, %s11
  $region1: #{tpu_custom_call.1} parent=0
    #allocation3 [shape = 'u8[1024]{0}', space=vmem, size = 0x400, scoped, tag = 'output window, operand 0, single buffered']
    #allocation4 [shape = 's32[1]{0}', space=sflag, size = 0x4, scoped, tag = 'scoped memory for tpu_custom_call.1']
    %15 = vsyncpa [#allocation4], 0
    // Predicated region
    $region2: #{tpu_custom_call.1} parent=1 // pred_check
      _
    $region3: #{tpu_custom_call.1} parent=1 // pred_check_branch
      %17 = sbr.rel (0) target = $region5
    $region4: #{tpu_custom_call.1} parent=1 // pred_region
      _
    $region5: #{tpu_custom_call.1} parent=1 // pred_fallthru
      _
    // Predicated region
    $region6: #{tpu_custom_call.1} parent=1 // pred_check
      _
    $region7: #{tpu_custom_call.1} parent=1 // pred_check_branch
      %19 = sbr.rel (0) target = $region9
    $region8: #{tpu_custom_call.1} parent=1 // pred_region
      _
    $region9: #{tpu_custom_call.1} parent=1 // pred_fallthru
      _
    // Predicated region
    $region10: #{tpu_custom_call.1} parent=1 // pred_check
      _
    $region11: #{tpu_custom_call.1} parent=1 // pred_check_branch
      %21 = sbr.rel (0) target = $region13
    $region12: #{tpu_custom_call.1} parent=1 // pred_region
      _
    $region13: #{tpu_custom_call.1} parent=1 // pred_fallthru
      _
    // Predicated region
    $region14: #{tpu_custom_call.1} parent=1 // pred_check
      _
    $region15: #{tpu_custom_call.1} parent=1 // pred_check_branch
      %23 = sbr.rel (0) target = $region17
    $region16: #{tpu_custom_call.1} parent=1 // pred_region
      _
    $region17: #{tpu_custom_call.1} parent=1 // pred_fallthru
      _
    // Predicated region
    $region18: #{tpu_custom_call.1} parent=1 // pred_check
      _
    $region19: #{tpu_custom_call.1} parent=1 // pred_check_branch
      %25 = sbr.rel (0) target = $region21
    $region20: #{tpu_custom_call.1} parent=1 // pred_region
      _
    $region21: #{tpu_custom_call.1} parent=1 // pred_fallthru
      _
    // Predicated region
    $region22: #{tpu_custom_call.1} parent=1 // pred_check
      _
    $region23: #{tpu_custom_call.1} parent=1 // pred_check_branch
      %27 = sbr.rel (0) target = $region25
    $region24: #{tpu_custom_call.1} parent=1 // pred_region
      _
    $region25: #{tpu_custom_call.1} parent=1 // pred_fallthru
      _
    // Predicated region
    $region26: #{tpu_custom_call.1} parent=1 // pred_check
      _
    $region27: #{tpu_custom_call.1} parent=1 // pred_check_branch
      %29 = sbr.rel (0) target = $region29
    $region28: #{tpu_custom_call.1} parent=1 // pred_region
      _
    $region29: #{tpu_custom_call.1} parent=1 // pred_fallthru
      _
    // Predicated region
    $region30: #{tpu_custom_call.1} parent=1 // pred_check
      _
    $region31: #{tpu_custom_call.1} parent=1 // pred_check_branch
      %31 = sbr.rel (0) target = $region33
    $region32: #{tpu_custom_call.1} parent=1 // pred_region
      _
    $region33: #{tpu_custom_call.1} parent=1 // pred_fallthru
      _
    // Predicated region
    $region34: #{tpu_custom_call.1} parent=1 // pred_check
      _
    $region35: #{tpu_custom_call.1} parent=1 // pred_check_branch
      %33 = sbr.rel (0) target = $region37
    $region36: #{tpu_custom_call.1} parent=1 // pred_region
      _
    $region37: #{tpu_custom_call.1} parent=1 // pred_fallthru
      _
    // Predicated region
    $region38: #{tpu_custom_call.1} parent=1 // pred_check
      _
    $region39: #{tpu_custom_call.1} parent=1 // pred_check_branch
      %35 = sbr.rel (0) target = $region41
    $region40: #{tpu_custom_call.1} parent=1 // pred_region
      _
    $region41: #{tpu_custom_call.1} parent=1 // pred_fallthru
      _
    %v37 = vld [vmem:[%s0] sm:$0xf]
    %v38 = vld [vmem:[%s0 + $0x4] sm:$0xf]
    %v39 = vld [vmem:[%s1] sm:$0xff]
    %v40 = vld [vmem:[%s1 + $0x8] sm:$0xff]
    %v41 = vld [vmem:[%s2] sm:$0xf]
    %v42 = vld [vmem:[%s2 + $0x4] sm:$0xf]
    %v43 = vld [vmem:[%s3] sm:$0x1]
    %v44 = vpack.c.bf16 %v40, %v39
    %v47 = vunpack.c.l.b16 %v37
    %v48 = vunpack.c.l.b16 %v38
    %v49 = vpack.c.b16 %v48, %v47
    %vm50 = vcmask 130048
    %v52 = vsel %vm50, %v49, 0
    %54 = vmatprep.subr.bf16.mxu0 0
    %55 = vmatpush1.bf16.msra.mxu0 %v44
    %56 = vmatprep.subr.bf16.mxu0 0
    %57 = vmatpush1.bf16.msra.mxu0 0
    %58 = vmatprep.subr.bf16.mxu0 0
    %59 = vmatpush1.bf16.msra.mxu0 0
    %60 = vmatprep.subr.bf16.mxu0 0
    %61 = vmatpush1.bf16.msra.mxu0 0
    %62 = vmatprep.subr.bf16.mxu0 0
    %63 = vmatpush1.bf16.msra.mxu0 0
    %64 = vmatprep.subr.bf16.mxu0 0
    %65 = vmatpush1.bf16.msra.mxu0 0
    %66 = vmatprep.subr.bf16.mxu0 0
    %67 = vmatpush1.bf16.msra.mxu0 0
    %68 = vmatprep.subr.bf16.mxu0 0
    %69 = vmatpush1.bf16.msra.mxu0 0
    %70 = vmatprep.subr.bf16.mxu0 0
    %71 = vmatpush1.bf16.msra.mxu0 0
    %72 = vmatprep.subr.bf16.mxu0 0
    %73 = vmatpush1.bf16.msra.mxu0 0
    %74 = vmatprep.subr.bf16.mxu0 0
    %75 = vmatpush1.bf16.msra.mxu0 0
    %76 = vmatprep.subr.bf16.mxu0 0
    %77 = vmatpush1.bf16.msra.mxu0 0
    %78 = vmatprep.subr.bf16.mxu0 0
    %79 = vmatpush1.bf16.msra.mxu0 0
    %80 = vmatprep.subr.bf16.mxu0 0
    %81 = vmatpush1.bf16.msra.mxu0 0
    %82 = vmatprep.subr.bf16.mxu0 0
    %83 = vmatpush1.bf16.msra.mxu0 0
    %84 = vmatprep.subr.bf16.mxu0 0
    %85 = vmatpush1.bf16.msra.mxu0 0
    %86 = vmatprep.mubr.bf16.mxu0 0
    %87 = vmatmul.mubr.bf16.gmra.mrb[0].mxu0 %v52
    %v88 = vpop.f32.mrb[0].mxu0
    %v89 = vadd.f32 0.0, %v88
    %v90 = vpop.f32.mrb[0].mxu0
    %v91 = vpop.f32.mrb[0].mxu0
    %v92 = vadd.f32 0.0, %v91
    %v93 = vpop.f32.mrb[0].mxu0
    %94 = vdwg.mxu0
    %97 = vrot.lane.b32.xlu0 %v39, 8
    %v98 = vpop.permute.xlu0 %97
    %99 = vrot.lane.b32.xlu0 %v40, 8
    %v100 = vpop.permute.xlu0 %99
    %vm103 = vcmask 64512
    %v104 = vsel %vm103, %v89, %v98
    %v105 = vsel %vm103, %v92, %v100
    %v106 = vpack.c.bf16 %v105, %v104
    %v108 = vlaneseq
    %v109 = vshrl.u32 %v108, 7
    %v110 = vsub.s32 0, %v109
    %v111 = vrot.slane %v43, %v110
    %v115 = vunpack.c.l.b16 %v41
    %v116 = vunpack.c.l.b16 %v42
    %v117 = vpack.c.b16 %v116, %v115
    %v120 = vsel %vm50, %v106, 0
    %122 = vmatprep.subr.bf16.mxu0 0
    %123 = vmatpush1.bf16.msra.mxu0 %v117
    %124 = vmatprep.subr.bf16.mxu0 0
    %125 = vmatpush1.bf16.msra.mxu0 0
    %126 = vmatprep.subr.bf16.mxu0 0
    %127 = vmatpush1.bf16.msra.mxu0 0
    %128 = vmatprep.subr.bf16.mxu0 0
    %129 = vmatpush1.bf16.msra.mxu0 0
    %130 = vmatprep.subr.bf16.mxu0 0
    %131 = vmatpush1.bf16.msra.mxu0 0
    %132 = vmatprep.subr.bf16.mxu0 0
    %133 = vmatpush1.bf16.msra.mxu0 0
    %134 = vmatprep.subr.bf16.mxu0 0
    %135 = vmatpush1.bf16.msra.mxu0 0
    %136 = vmatprep.subr.bf16.mxu0 0
    %137 = vmatpush1.bf16.msra.mxu0 0
    %138 = vmatprep.subr.bf16.mxu0 0
    %139 = vmatpush1.bf16.msra.mxu0 0
    %140 = vmatprep.subr.bf16.mxu0 0
    %141 = vmatpush1.bf16.msra.mxu0 0
    %142 = vmatprep.subr.bf16.mxu0 0
    %143 = vmatpush1.bf16.msra.mxu0 0
    %144 = vmatprep.subr.bf16.mxu0 0
    %145 = vmatpush1.bf16.msra.mxu0 0
    %146 = vmatprep.subr.bf16.mxu0 0
    %147 = vmatpush1.bf16.msra.mxu0 0
    %148 = vmatprep.subr.bf16.mxu0 0
    %149 = vmatpush1.bf16.msra.mxu0 0
    %150 = vmatprep.subr.bf16.mxu0 0
    %151 = vmatpush1.bf16.msra.mxu0 0
    %152 = vmatprep.subr.bf16.mxu0 0
    %153 = vmatpush1.bf16.msra.mxu0 0
    %154 = vmatprep.mubr.bf16.mxu0 0
    %155 = vmatmul.mubr.bf16.gmra.mrb[0].mxu0 %v120
    %v156 = vpop.f32.mrb[0].mxu0
    %v157 = vadd.f32 %v111, %v156
    %v158 = vpop.f32.mrb[0].mxu0
    %v159 = vpop.f32.mrb[0].mxu0
    %v160 = vadd.f32 %v111, %v159
    %v161 = vpop.f32.mrb[0].mxu0
    %162 = vdwg.mxu0
    %vm163 = vcmask 261120
    %164 = vst.msk [vmem:[#allocation2] sm:$0xff] %vm163, %v157
    %165 = vst.msk [vmem:[#allocation2 + $0x8] sm:$0xff] %vm163, %v160
    %v166 = vld [vmem:[%s4] sm:$0xf]
    %v167 = vld [vmem:[%s4 + $0x4] sm:$0xf]
    %v168 = vld [vmem:[%s4 + $0x8] sm:$0xf]
    %v169 = vld [vmem:[%s4 + $0xc] sm:$0xf]
    %v170 = vld [vmem:[%s4 + $0x10] sm:$0xf]
    %v171 = vld [vmem:[%s4 + $0x14] sm:$0xf]
    %v172 = vld [vmem:[%s4 + $0x18] sm:$0xf]
    %v173 = vld [vmem:[%s4 + $0x1c] sm:$0xf]
    %v174 = vld [vmem:[%s5] sm:$0x1]
    %v175 = vpack.c.bf16 %v160, %v157
    %176 = vmatprep.subr.bf16.mxu0 0
    %177 = vmatpush1.bf16.msra.mxu0 %v175
    %178 = vmatprep.subr.bf16.mxu0 0
    %179 = vmatpush1.bf16.msra.mxu0 0
    %180 = vmatprep.subr.bf16.mxu0 0
    %181 = vmatpush1.bf16.msra.mxu0 0
    %182 = vmatprep.subr.bf16.mxu0 0
    %183 = vmatpush1.bf16.msra.mxu0 0
    %184 = vmatprep.subr.bf16.mxu0 0
    %185 = vmatpush1.bf16.msra.mxu0 0
    %186 = vmatprep.subr.bf16.mxu0 0
    %187 = vmatpush1.bf16.msra.mxu0 0
    %188 = vmatprep.subr.bf16.mxu0 0
    %189 = vmatpush1.bf16.msra.mxu0 0
    %190 = vmatprep.subr.bf16.mxu0 0
    %191 = vmatpush1.bf16.msra.mxu0 0
    %192 = vmatprep.subr.bf16.mxu0 0
    %193 = vmatpush1.bf16.msra.mxu0 0
    %194 = vmatprep.subr.bf16.mxu0 0
    %195 = vmatpush1.bf16.msra.mxu0 0
    %196 = vmatprep.subr.bf16.mxu0 0
    %197 = vmatpush1.bf16.msra.mxu0 0
    %198 = vmatprep.subr.bf16.mxu0 0
    %199 = vmatpush1.bf16.msra.mxu0 0
    %200 = vmatprep.subr.bf16.mxu0 0
    %201 = vmatpush1.bf16.msra.mxu0 0
    %202 = vmatprep.subr.bf16.mxu0 0
    %203 = vmatpush1.bf16.msra.mxu0 0
    %204 = vmatprep.subr.bf16.mxu0 0
    %205 = vmatpush1.bf16.msra.mxu0 0
    %206 = vmatprep.subr.bf16.mxu0 0
    %207 = vmatpush1.bf16.msra.mxu0 0
    %208 = vmatprep.mubr.bf16.mxu0 0
    %209 = vmatmul.mubr.bf16.gmra.mrb[0].mxu0 %v52
    %v210 = vpop.f32.mrb[0].mxu0
    %v211 = vadd.f32 0.0, %v210
    %v212 = vpop.f32.mrb[0].mxu0
    %v213 = vpop.f32.mrb[0].mxu0
    %v214 = vadd.f32 0.0, %v213
    %v215 = vpop.f32.mrb[0].mxu0
    %216 = vdwg.mxu0
    %219 = vrot.lane.b32.xlu0 %v157, 32
    %v220 = vpop.permute.xlu0 %219
    %221 = vrot.lane.b32.xlu0 %v160, 32
    %v222 = vpop.permute.xlu0 %221
    %v225 = vsel %vm163, %v211, %v220
    %v226 = vsel %vm163, %v214, %v222
    %v227 = vpack.c.bf16 %v226, %v225
    %v229 = vlaneseq
    %v230 = vshrl.u32 %v229, 7
    %v231 = vsub.s32 0, %v230
    %v232 = vrot.slane %v174, %v231
    %v242 = vunpack.c.l.b16 %v166
    %v243 = vunpack.c.l.b16 %v167
    %v244 = vunpack.c.l.b16 %v168
    %v245 = vunpack.c.l.b16 %v169
    %v246 = vunpack.c.l.b16 %v170
    %v247 = vunpack.c.l.b16 %v171
    %v248 = vunpack.c.l.b16 %v172
    %v249 = vunpack.c.l.b16 %v173
    %v250 = vpack.c.b16 %v243, %v242
    %v251 = vpack.c.b16 %v245, %v244
    %v252 = vpack.c.b16 %v247, %v246
    %v253 = vpack.c.b16 %v249, %v248
    %vm258 = vcmask 523264
    %v260 = vsel %vm258, %v227, 0
    %262 = vmatprep.subr.bf16.mxu0 0
    %263 = vmatpush1.bf16.msra.mxu0 %v250
    %264 = vmatprep.subr.bf16.mxu0 0
    %265 = vmatpush1.bf16.msra.mxu0 %v251
    %266 = vmatprep.subr.bf16.mxu0 0
    %267 = vmatpush1.bf16.msra.mxu0 %v252
    %268 = vmatprep.subr.bf16.mxu0 0
    %269 = vmatpush1.bf16.msra.mxu0 %v253
    %270 = vmatprep.subr.bf16.mxu0 0
    %271 = vmatpush1.bf16.msra.mxu0 0
    %272 = vmatprep.subr.bf16.mxu0 0
    %273 = vmatpush1.bf16.msra.mxu0 0
    %274 = vmatprep.subr.bf16.mxu0 0
    %275 = vmatpush1.bf16.msra.mxu0 0
    %276 = vmatprep.subr.bf16.mxu0 0
    %277 = vmatpush1.bf16.msra.mxu0 0
    %278 = vmatprep.subr.bf16.mxu0 0
    %279 = vmatpush1.bf16.msra.mxu0 0
    %280 = vmatprep.subr.bf16.mxu0 0
    %281 = vmatpush1.bf16.msra.mxu0 0
    %282 = vmatprep.subr.bf16.mxu0 0
    %283 = vmatpush1.bf16.msra.mxu0 0
    %284 = vmatprep.subr.bf16.mxu0 0
    %285 = vmatpush1.bf16.msra.mxu0 0
    %286 = vmatprep.subr.bf16.mxu0 0
    %287 = vmatpush1.bf16.msra.mxu0 0
    %288 = vmatprep.subr.bf16.mxu0 0
    %289 = vmatpush1.bf16.msra.mxu0 0
    %290 = vmatprep.subr.bf16.mxu0 0
    %291 = vmatpush1.bf16.msra.mxu0 0
    %292 = vmatprep.subr.bf16.mxu0 0
    %293 = vmatpush1.bf16.msra.mxu0 0
    %294 = vmatprep.mubr.bf16.mxu0 0
    %295 = vmatmul.mubr.bf16.gmra.mrb[0].mxu0 %v260
    %v296 = vpop.f32.mrb[0].mxu0
    %v297 = vadd.f32 %v232, %v296
    %v298 = vpop.f32.mrb[0].mxu0
    %v299 = vpop.f32.mrb[0].mxu0
    %v300 = vadd.f32 %v232, %v299
    %v301 = vpop.f32.mrb[0].mxu0
    %302 = vdwg.mxu0
    %305 = vrot.lane.b32.xlu0 %v297, 32
    %v306 = vpop.permute.xlu0 %305
    %307 = vrot.lane.b32.xlu0 %v300, 32
    %v308 = vpop.permute.xlu0 %307
    %vm311 = vcmask 523520
    %312 = vst.msk [vmem:[#allocation2] sm:$0xff] %vm311, %v306
    %313 = vst.msk [vmem:[#allocation2 + $0x8] sm:$0xff] %vm311, %v308
    %v314 = vld [vmem:[#allocation2] sm:$0xff]
    %v315 = vld [vmem:[#allocation2 + $0x8] sm:$0xff]
    %v316 = vsel %vm258, %v314, -inf
    %v317 = vrot.slane %v316, 4
    %v318 = vmax.f32 %v316, %v317
    %v319 = vrot.slane %v318, 2
    %v320 = vmax.f32 %v318, %v319
    %v321 = vrot.slane %v320, 1
    %v322 = vmax.f32 %v320, %v321
    %v323 = vsel %vm258, %v315, -inf
    %v324 = vrot.slane %v323, 4
    %v325 = vmax.f32 %v323, %v324
    %v326 = vrot.slane %v325, 2
    %v327 = vmax.f32 %v325, %v326
    %v328 = vrot.slane %v327, 1
    %v329 = vmax.f32 %v327, %v328
    %vm330 = vcmask 1040384
    %v331 = vsel %vm330, %v322, %v329
    %v332 = vpack.c.bf16 %v331, %v331
    %v333 = vld [vmem:[%s6] sm:$0xf]
    %v334 = vld [vmem:[%s6 + $0x4] sm:$0xf]
    %v335 = vld [vmem:[%s6 + $0x8] sm:$0xf]
    %v336 = vld [vmem:[%s6 + $0xc] sm:$0xf]
    %v337 = vld [vmem:[%s6 + $0x10] sm:$0xf]
    %v338 = vld [vmem:[%s6 + $0x14] sm:$0xf]
    %v339 = vld [vmem:[%s6 + $0x18] sm:$0xf]
    %v340 = vld [vmem:[%s6 + $0x1c] sm:$0xf]
    %v341 = vld [vmem:[%s7] sm:$0x1]
    %v343 = vlaneseq
    %v344 = vshrl.u32 %v343, 7
    %v345 = vsub.s32 0, %v344
    %v346 = vrot.slane %v341, %v345
    %v356 = vunpack.c.l.b16 %v333
    %v357 = vunpack.c.l.b16 %v334
    %v358 = vunpack.c.l.b16 %v335
    %v359 = vunpack.c.l.b16 %v336
    %v360 = vunpack.c.l.b16 %v337
    %v361 = vunpack.c.l.b16 %v338
    %v362 = vunpack.c.l.b16 %v339
    %v363 = vunpack.c.l.b16 %v340
    %v364 = vpack.c.b16 %v357, %v356
    %v365 = vpack.c.b16 %v359, %v358
    %v366 = vpack.c.b16 %v361, %v360
    %v367 = vpack.c.b16 %v363, %v362
    %v373 = vsel %vm258, %v332, 0
    %375 = vmatprep.subr.bf16.mxu0 0
    %376 = vmatpush1.bf16.msra.mxu0 %v364
    %377 = vmatprep.subr.bf16.mxu0 0
    %378 = vmatpush1.bf16.msra.mxu0 %v365
    %379 = vmatprep.subr.bf16.mxu0 0
    %380 = vmatpush1.bf16.msra.mxu0 %v366
    %381 = vmatprep.subr.bf16.mxu0 0
    %382 = vmatpush1.bf16.msra.mxu0 %v367
    %383 = vmatprep.subr.bf16.mxu0 0
    %384 = vmatpush1.bf16.msra.mxu0 0
    %385 = vmatprep.subr.bf16.mxu0 0
    %386 = vmatpush1.bf16.msra.mxu0 0
    %387 = vmatprep.subr.bf16.mxu0 0
    %388 = vmatpush1.bf16.msra.mxu0 0
    %389 = vmatprep.subr.bf16.mxu0 0
    %390 = vmatpush1.bf16.msra.mxu0 0
    %391 = vmatprep.subr.bf16.mxu0 0
    %392 = vmatpush1.bf16.msra.mxu0 0
    %393 = vmatprep.subr.bf16.mxu0 0
    %394 = vmatpush1.bf16.msra.mxu0 0
    %395 = vmatprep.subr.bf16.mxu0 0
    %396 = vmatpush1.bf16.msra.mxu0 0
    %397 = vmatprep.subr.bf16.mxu0 0
    %398 = vmatpush1.bf16.msra.mxu0 0
    %399 = vmatprep.subr.bf16.mxu0 0
    %400 = vmatpush1.bf16.msra.mxu0 0
    %401 = vmatprep.subr.bf16.mxu0 0
    %402 = vmatpush1.bf16.msra.mxu0 0
    %403 = vmatprep.subr.bf16.mxu0 0
    %404 = vmatpush1.bf16.msra.mxu0 0
    %405 = vmatprep.subr.bf16.mxu0 0
    %406 = vmatpush1.bf16.msra.mxu0 0
    %407 = vmatprep.mubr.bf16.mxu0 0
    %408 = vmatmul.mubr.bf16.gmra.mrb[0].mxu0 %v373
    %v409 = vpop.f32.mrb[0].mxu0
    %v410 = vadd.f32 %v346, %v409
    %v411 = vpop.f32.mrb[0].mxu0
    %v412 = vpop.f32.mrb[0].mxu0
    %v413 = vpop.f32.mrb[0].mxu0
    %414 = vdwg.mxu0
    %v415 = vmax.f32 %v410, 0.0
    %v416 = vpack.c.bf16 %v415, %v415
    %v417 = vld [vmem:[%s8] sm:$0xf]
    %v418 = vld [vmem:[%s8 + $0x4] sm:$0xf]
    %v419 = vld [vmem:[%s8 + $0x8] sm:$0xf]
    %v420 = vld [vmem:[%s8 + $0xc] sm:$0xf]
    %v421 = vld [vmem:[%s9] sm:$0x1]
    %v423 = vlaneseq
    %v424 = vshrl.u32 %v423, 7
    %v425 = vsub.s32 0, %v424
    %v426 = vrot.slane %v421, %v425
    %v432 = vunpack.c.l.b16 %v417
    %v433 = vunpack.c.l.b16 %v418
    %v434 = vunpack.c.l.b16 %v419
    %v435 = vunpack.c.l.b16 %v420
    %v436 = vpack.c.b16 %v433, %v432
    %v437 = vpack.c.b16 %v435, %v434
    %v441 = vsel %vm163, %v416, 0
    %443 = vmatprep.subr.bf16.mxu0 0
    %444 = vmatpush1.bf16.msra.mxu0 %v436
    %445 = vmatprep.subr.bf16.mxu0 0
    %446 = vmatpush1.bf16.msra.mxu0 %v437
    %447 = vmatprep.subr.bf16.mxu0 0
    %448 = vmatpush1.bf16.msra.mxu0 0
    %449 = vmatprep.subr.bf16.mxu0 0
    %450 = vmatpush1.bf16.msra.mxu0 0
    %451 = vmatprep.subr.bf16.mxu0 0
    %452 = vmatpush1.bf16.msra.mxu0 0
    %453 = vmatprep.subr.bf16.mxu0 0
    %454 = vmatpush1.bf16.msra.mxu0 0
    %455 = vmatprep.subr.bf16.mxu0 0
    %456 = vmatpush1.bf16.msra.mxu0 0
    %457 = vmatprep.subr.bf16.mxu0 0
    %458 = vmatpush1.bf16.msra.mxu0 0
    %459 = vmatprep.subr.bf16.mxu0 0
    %460 = vmatpush1.bf16.msra.mxu0 0
    %461 = vmatprep.subr.bf16.mxu0 0
    %462 = vmatpush1.bf16.msra.mxu0 0
    %463 = vmatprep.subr.bf16.mxu0 0
    %464 = vmatpush1.bf16.msra.mxu0 0
    %465 = vmatprep.subr.bf16.mxu0 0
    %466 = vmatpush1.bf16.msra.mxu0 0
    %467 = vmatprep.subr.bf16.mxu0 0
    %468 = vmatpush1.bf16.msra.mxu0 0
    %469 = vmatprep.subr.bf16.mxu0 0
    %470 = vmatpush1.bf16.msra.mxu0 0
    %471 = vmatprep.subr.bf16.mxu0 0
    %472 = vmatpush1.bf16.msra.mxu0 0
    %473 = vmatprep.subr.bf16.mxu0 0
    %474 = vmatpush1.bf16.msra.mxu0 0
    %475 = vmatprep.mubr.bf16.mxu0 0
    %476 = vmatmul.mubr.bf16.gmra.mrb[0].mxu0 %v441
    %v477 = vpop.f32.mrb[0].mxu0
    %v478 = vadd.f32 %v426, %v477
    %v479 = vpop.f32.mrb[0].mxu0
    %v480 = vpop.f32.mrb[0].mxu0
    %v481 = vpop.f32.mrb[0].mxu0
    %482 = vdwg.mxu0
    %483 = vst [vmem:[#allocation3] sm:$0x3] %v478
    // Predicated region
    $region42: #{tpu_custom_call.1} parent=1 // pred_check
      _
    $region43: #{tpu_custom_call.1} parent=1 // pred_check_branch
      %485 = sbr.rel (0) target = $region45
    $region44: #{tpu_custom_call.1} parent=1 // pred_region
      %s487 = ssub.s32 32, 32
      %488 = vsyncadd [#allocation4], %s487
      %s490 = sshll.u32 [#allocation3], 4
      %s491 = int_to_ptr.vmem [resolvable:$true] %s490
      %493 = dma.vmem_to_hbm [thread:$0]  %s491, 32, %s10, [#allocation4]
    $region45: #{tpu_custom_call.1} parent=1 // pred_fallthru
      _
    // Predicated region
    $region46: #{tpu_custom_call.1} parent=1 // pred_check
      _
    $region47: #{tpu_custom_call.1} parent=1 // pred_check_branch
      %495 = sbr.rel (0) target = $region49
    $region48: #{tpu_custom_call.1} parent=1 // pred_region
      %496 = dma.done [#allocation4], 32
    $region49: #{tpu_custom_call.1} parent=1 // pred_fallthru
      _
    %497 = vsyncpa [#allocation4], 1

</llo_original>
